<compile_context>
chip_gen: v7x
topology: tpu7x:2x2x1
jax: 0.10.0
libtpu: 0.0.40
codegen_flags: <defaults>
</compile_context>

<pallas_src>
import jax
import jax.numpy as jnp
from jax import lax
from jax.experimental import pallas as pl
from jax.experimental.pallas import tpu as pltpu


_VMEM_LIMIT = 48 * 1024 * 1024  # safe on v5e/v6e (128 MiB) and v7x (64 MiB)


def _round_up(x, m):
    return ((x + m - 1) // m) * m


# ----------------------------- tiled matmul kernel -------------------------- #

def _mm_kernel(a_ref, b_ref, o_ref, acc_ref):
    @pl.when(pl.program_id(2) == 0)
    def _init():
        acc_ref[...] = jnp.zeros_like(acc_ref)

    acc_ref[...] += jnp.dot(a_ref[...], b_ref[...],
                            preferred_element_type=jnp.float32)

    @pl.when(pl.program_id(2) == pl.num_programs(2) - 1)
    def _finalize():
        o_ref[...] = acc_ref[...].astype(o_ref.dtype)


def matmul_tiled(a, b, *, out_dtype=jnp.float32):
    """(M, K) @ (K, N) -> (M, N).  Pads K/N to multiples of 128 (MXU-friendly)
    and tiles with a VMEM accumulator so the pipeline double-buffers HBM."""
    M, K = a.shape
    K2, N = b.shape
    assert K == K2
    tm = 512 if M >= 512 else _round_up(M, 8)
    tk = 256 if K >= 256 else _round_up(K, 128)
    tn = 256 if N >= 256 else _round_up(N, 128)
    Mp, Kp, Np = _round_up(M, tm), _round_up(K, tk), _round_up(N, tn)
    a_p = jnp.pad(a, ((0, Mp - M), (0, Kp - K))) if (Mp, Kp) != (M, K) else a
    b_p = jnp.pad(b, ((0, Kp - K), (0, Np - N))) if (Kp, Np) != (K, N) else b

    out = pl.pallas_call(
        _mm_kernel,
        out_shape=jax.ShapeDtypeStruct((Mp, Np), out_dtype),
        grid=(Mp // tm, Np // tn, Kp // tk),
        in_specs=[pl.BlockSpec((tm, tk), lambda i, j, k: (i, k)),
                  pl.BlockSpec((tk, tn), lambda i, j, k: (k, j))],
        out_specs=pl.BlockSpec((tm, tn), lambda i, j, k: (i, j)),
        scratch_shapes=[pltpu.VMEM((tm, tn), jnp.float32)],
        compiler_params=pltpu.CompilerParams(
            dimension_semantics=("parallel", "parallel", "arbitrary"),
            vmem_limit_bytes=_VMEM_LIMIT),
    )(a_p, b_p)
    if (Mp, Np) != (M, N):
        out = out[:M, :N]
    return out


# ----------------------- fused attention (+out_proj) kernel ----------------- #

def _make_attn_kernel(nh, relative):
    def kernel(*refs):
        if relative:
            q_ref, k_ref, v_ref, bias_ref, w_ref, o_ref = refs
        else:
            q_ref, k_ref, v_ref, w_ref, o_ref = refs

        acc = None
        for h in range(nh):                      # static unroll over heads
            q_h = q_ref[0, h]                    # (tq, dkh) -- pre-scaled q
            k_h = k_ref[0, h]                    # (L, dkh)
            v_h = v_ref[0, h]                    # (L, dvh)
            # contract the (minor) dkh axis of both operands: no in-kernel
            # transpose of k is materialized.
            logits = lax.dot_general(
                q_h, k_h, (((1,), (1,)), ((), ())),
                preferred_element_type=jnp.float32)          # (tq, L)
            if relative:
                logits = logits + bias_ref[0, h]
            m = jnp.max(logits, axis=-1, keepdims=True)
            p = jnp.exp(logits - m)
            s = jnp.sum(p, axis=-1, keepdims=True)
            inv = pl.reciprocal(s, approx=True)              # EUP slot
            inv = inv * (2.0 - s * inv)                      # Newton step -> ~f32
            w = p * inv
            attn_h = jnp.dot(w, v_h, preferred_element_type=jnp.float32)   # (tq, dvh)
            # fused out_proj: accumulate this head's contribution to (tq, dv)
            out_h = jnp.dot(attn_h, w_ref[h], preferred_element_type=jnp.float32)
            acc = out_h if acc is None else acc + out_h
        o_ref[0] = acc.astype(o_ref.dtype)
    return kernel


def _choose_q_tile(L, nh):
    # Cap the double-buffered (nh, tq, L) f32 bias block at ~12 MiB so the
    # kernel also fits comfortably inside v7x's 64 MiB VMEM.
    budget = 12 * 1024 * 1024
    per_row = 2 * nh * L * 4
    tq = budget // max(per_row, 1)
    tq = min(tq, 512, L)
    if tq >= L:
        return L
    return max(8, (tq // 8) * 8)


def pallas_attention(q, k, v, w_out, bias=None):
    """q,k: (B, nh, L, dkh); v: (B, nh, L, dvh); w_out: (nh, dvh, dv);
    bias: (B, nh, L, L) or None.  Returns the out_proj'ed (B, L, dv) slab."""
    B, nh, L, dkh = q.shape
    dvh = v.shape[-1]
    dv = w_out.shape[-1]
    relative = bias is not None
    tq = _choose_q_tile(L, nh)
    nqt = pl.cdiv(L, tq)

    in_specs = [
        pl.BlockSpec((1, nh, tq, dkh), lambda b, qi: (b, 0, qi, 0)),
        pl.BlockSpec((1, nh, L, dkh), lambda b, qi: (b, 0, 0, 0)),   # resident
        pl.BlockSpec((1, nh, L, dvh), lambda b, qi: (b, 0, 0, 0)),   # resident
    ]
    inputs = [q, k, v]
    if relative:
        in_specs.append(pl.BlockSpec((1, nh, tq, L), lambda b, qi: (b, 0, qi, 0)))
        inputs.append(bias)
    in_specs.append(pl.BlockSpec((nh, dvh, dv), lambda b, qi: (0, 0, 0)))
    inputs.append(w_out)

    return pl.pallas_call(
        _make_attn_kernel(nh, relative),
        out_shape=jax.ShapeDtypeStruct((B, L, dv), jnp.float32),
        grid=(B, nqt),
        in_specs=in_specs,
        out_specs=pl.BlockSpec((1, tq, dv), lambda b, qi: (b, qi, 0)),
        compiler_params=pltpu.CompilerParams(
            dimension_semantics=("parallel", "arbitrary"),
            vmem_limit_bytes=_VMEM_LIMIT),
    )(*inputs)


# --------------------------- conv glue (Pallas matmul) ---------------------- #

def conv1x1_slab(x_nhwc, w_oc, stride=1):
    """1x1 conv, no bias, in channel-last slab form. x: (B,H,W,C), w: (O,C)."""
    if stride != 1:
        x_nhwc = x_nhwc[:, ::stride, ::stride, :]
    B, H, W, C = x_nhwc.shape
    O = w_oc.shape[0]
    out = matmul_tiled(x_nhwc.reshape(B * H * W, C), w_oc.T)
    return out.reshape(B, H, W, O)


def conv2d_im2col_slab(x_nhwc, w, stride, padding):
    """KxK conv, no bias, via im2col + tiled Pallas matmul (channel-last)."""
    # TODO(synk): at production sizes, replace the kh*kw im2col HBM blow-up
    # with a halo-tiled gather inside a Pallas kernel.
    B, H, W, C = x_nhwc.shape
    O, _, kh, kw = w.shape
    xp = jnp.pad(x_nhwc, ((0, 0), (padding, padding), (padding, padding), (0, 0)))
    Ho = (H + 2 * padding - kh) // stride + 1
    Wo = (W + 2 * padding - kw) // stride + 1
    patches = []
    for i in range(kh):
        for j in range(kw):
            patches.append(xp[:, i:i + stride * Ho:stride, j:j + stride * Wo:stride, :])
    cols = jnp.concatenate(patches, axis=-1)                  # (B, Ho, Wo, kh*kw*C)
    a = cols.reshape(B * Ho * Wo, kh * kw * C)
    wmat = w.transpose(2, 3, 1, 0).reshape(kh * kw * C, O)    # matches patch order
    out = matmul_tiled(a, wmat)
    return out.reshape(B, Ho, Wo, O)


# ------------------------ relative-position logits (glue) ------------------- #
# TODO(synk): rel_to_abs pad/flatten/reshape re-indexing has no clean Pallas
# equivalent; it stays as plain-JAX layout glue (no heavy compute).

def rel_to_abs(x):
    B, nh, L, _ = x.shape
    x = jnp.pad(x, ((0, 0), (0, 0), (0, 0), (0, 1)))
    x = x.reshape(B, nh, L * 2 * L)
    x = jnp.pad(x, ((0, 0), (0, 0), (0, L - 1)))
    x = x.reshape(B, nh, L + 1, 2 * L - 1)
    return x[:, :, :L, L - 1:]


def relative_logits_1d(q, rel_k):
    # q: (B, nh, H, W, dkh), rel_k: (dkh, 2W-1)
    B, nh, H, W, dkh = q.shape
    rel_logits = jnp.einsum('bnhwd,dm->bnhwm', q, rel_k)
    rel_logits = rel_logits.reshape(B, nh * H, W, 2 * W - 1)
    rel_logits = rel_to_abs(rel_logits)                       # (B, nh*H, W, W)
    rel_logits = rel_logits.reshape(B, nh, H, 1, W, W)
    return jnp.broadcast_to(rel_logits, (B, nh, H, H, W, W))


# ------------------------------- full forward ------------------------------- #

def aa_conv2d_forward(x, params, *, dk, dv, nh, relative, kernel_size, stride,
                      out_channels):
    B, Cin, H0, W0 = x.shape
    dkh, dvh = dk // nh, dv // nh

    # One layout conversion at entry (NCHW -> NHWC); everything stays slab-form.
    x_nhwc = jnp.transpose(x, (0, 2, 3, 1))

    # Fold the (dkh)^-0.5 query scaling into the in_proj weight: identical math
    # (applies to both content and relative logits) and saves an HBM pass.
    w_qkv = params['in_proj_qkv'].reshape(2 * dk + dv, Cin)
    q_scale = jnp.concatenate([jnp.full((dk,), dkh ** -0.5, w_qkv.dtype),
                               jnp.ones((dk + dv,), w_qkv.dtype)])
    w_qkv = w_qkv * q_scale[:, None]

    qkv = conv1x1_slab(x_nhwc, w_qkv, stride=stride)          # (B, H, W, 2dk+dv)
    _, H, W, _ = qkv.shape
    L = H * W

    q = qkv[..., :dk]                                         # already scaled
    k = qkv[..., dk:2 * dk]
    v = qkv[..., 2 * dk:]

    q_heads = q.reshape(B, L, nh, dkh).transpose(0, 2, 1, 3)  # (B, nh, L, dkh)
    k_heads = k.reshape(B, L, nh, dkh).transpose(0, 2, 1, 3)
    v_heads = v.reshape(B, L, nh, dvh).transpose(0, 2, 1, 3)

    if relative:
        q5 = q.reshape(B, H, W, nh, dkh).transpose(0, 3, 1, 2, 4)     # (B,nh,H,W,dkh)
        w_rel = relative_logits_1d(q5, params['key_rel_w'])           # (B,nh,H,H,W,W)
        h_rel = relative_logits_1d(q5.transpose(0, 1, 3, 2, 4),
                                   params['key_rel_h'])               # (B,nh,W,W,H,H)
        w_rel = w_rel.transpose(0, 1, 2, 4, 3, 5).reshape(B, nh, L, L)
        h_rel = h_rel.transpose(0, 1, 4, 2, 5, 3).reshape(B, nh, L, L)
        bias = (h_rel + w_rel).astype(jnp.float32)
    else:
        bias = None   # bias-less kernel variant: no (B,nh,L,L) zeros through HBM

    # out_proj (dv,dv,1,1) -> per-head (nh, dvh, dv) matrices fused in-kernel.
    w_out_heads = params['out_proj'].reshape(dv, nh, dvh).transpose(1, 2, 0)

    attn_out = pallas_attention(q_heads, k_heads, v_heads, w_out_heads, bias)
    attn_out = attn_out.reshape(B, H, W, dv)                  # lane-dense slab

    if out_channels > dv:
        conv_out = conv2d_im2col_slab(x_nhwc, params['conv'], stride,
                                      kernel_size // 2)
        out_nhwc = jnp.concatenate([conv_out, attn_out], axis=-1)
    else:
        out_nhwc = attn_out
    # One layout conversion at exit (NHWC -> NCHW).
    return jnp.transpose(out_nhwc, (0, 3, 1, 2))


# ------------------------------ pure-JAX reference -------------------------- #

def aa_conv2d_reference(x, params, *, dk, dv, nh, relative, kernel_size, stride,
                        out_channels):
    B = x.shape[0]
    dkh, dvh = dk // nh, dv // nh
    dn = ('NCHW', 'OIHW', 'NCHW')

    qkv = lax.conv_general_dilated(x, params['in_proj_qkv'], (stride, stride),
                                   [(0, 0), (0, 0)], dimension_numbers=dn)
    _, _, H, W = qkv.shape
    L = H * W
    q, k, v = qkv[:, :dk], qkv[:, dk:2 * dk], qkv[:, 2 * dk:]
    flat_q = q.reshape(B, nh, dkh, L) * (dkh ** -0.5)
    flat_k = k.reshape(B, nh, dkh, L)
    flat_v = v.reshape(B, nh, dvh, L)
    logits = jnp.einsum('bhci,bhcj->bhij', flat_q, flat_k)
    if relative:
        q5 = flat_q.reshape(B, nh, dkh, H, W).transpose(0, 1, 3, 4, 2)
        w_rel = relative_logits_1d(q5, params['key_rel_w'])
        h_rel = relative_logits_1d(q5.transpose(0, 1, 3, 2, 4), params['key_rel_h'])
        w_rel = w_rel.transpose(0, 1, 2, 4, 3, 5).reshape(B, nh, L, L)
        h_rel = h_rel.transpose(0, 1, 4, 2, 5, 3).reshape(B, nh, L, L)
        logits = logits + h_rel + w_rel
    wts = jax.nn.softmax(logits, axis=-1)
    attn = jnp.einsum('bhij,bhcj->bhic', wts, flat_v)                # (B,nh,L,dvh)
    attn = attn.transpose(0, 1, 3, 2).reshape(B, dv, H, W)
    attn_out = lax.conv_general_dilated(attn, params['out_proj'], (1, 1),
                                        [(0, 0), (0, 0)], dimension_numbers=dn)
    if out_channels > dv:
        p = kernel_size // 2
        conv_out = lax.conv_general_dilated(x, params['conv'], (stride, stride),
                                            [(p, p), (p, p)], dimension_numbers=dn)
        return jnp.concatenate([conv_out, attn_out], axis=1)
    return attn_out


# ------------------------------------ main ----------------------------------- #

if __name__ == "__main__":
    # Module config (small, consistent with AAConv2d constraints).
    B, Cin, H0, W0 = 2, 4, 16, 16
    out_channels, kernel_size, stride = 8, 3, 1
    dk, dv, nh, relative = 8, 4, 2, True
    input_dims = (H0, W0)

    key = jax.random.PRNGKey(0)
    k1, k2, k3, k4, k5, k6 = jax.random.split(key, 6)

    params = {
        'conv': 0.1 * jax.random.normal(k1, (out_channels - dv, Cin,
                                             kernel_size, kernel_size), jnp.float32),
        'in_proj_qkv': 0.1 * jax.random.normal(k2, (2 * dk + dv, Cin, 1, 1), jnp.float32),
        'out_proj': 0.1 * jax.random.normal(k3, (dv, dv, 1, 1), jnp.float32),
        'key_rel_h': dk ** (-0.5) + jax.random.normal(k4, (dk // nh, 2 * input_dims[0] - 1),
                                                      jnp.float32),
        'key_rel_w': dk ** (-0.5) + jax.random.normal(k5, (dk // nh, 2 * input_dims[1] - 1),
                                                      jnp.float32),
    }
    x = jax.random.normal(k6, (B, Cin, H0, W0), jnp.float32)

    cfg = dict(dk=dk, dv=dv, nh=nh, relative=relative, kernel_size=kernel_size,
               stride=stride, out_channels=out_channels)

    out = aa_conv2d_forward(x, params, **cfg)
    out = jax.block_until_ready(out)

    ref = jax.block_until_ready(aa_conv2d_reference(x, params, **cfg))
    assert out.shape == (B, out_channels, H0, W0), out.shape
    assert jnp.allclose(out, ref, atol=2e-3, rtol=2e-3), \
        float(jnp.max(jnp.abs(out - ref)))

    print("KERNEL_OK")
</pallas_src>

<mosaic_0001>
module attributes {stable_mosaic.version = 11 : i64} {
  func.func @_mm_kernel(%arg0: i32, %arg1: i32, %arg2: i32, %arg3: memref<512x128xf32, #tpu.memory_space<vmem>>, %arg4: memref<128x128xf32, #tpu.memory_space<vmem>>, %arg5: memref<512x128xf32, #tpu.memory_space<vmem>>, %arg6: memref<512x128xf32, #tpu.memory_space<vmem>>) attributes {dimension_semantics = [#tpu.dimension_semantics<parallel>, #tpu.dimension_semantics<parallel>, #tpu.dimension_semantics<arbitrary>], iteration_bounds = array<i64: 1, 1, 1>, scalar_prefetch = 0 : i64, scratch_operands = 1 : i64, tpu.core_type = #tpu.core_type<tc>, window_params = [{transform_indices = @transform_0, window_bounds = array<i64: 512, 128>}, {transform_indices = @transform_1, window_bounds = array<i64: 128, 128>}, {transform_indices = @transform_2, window_bounds = array<i64: 512, 128>}]} {
    %c0_i32 = arith.constant 0 : i32
    %0 = arith.cmpi eq, %arg2, %c0_i32 : i32
    %1 = arith.extui %0 : i1 to i32
    %c0_i32_0 = arith.constant 0 : i32
    %2 = arith.cmpi ne, %1, %c0_i32_0 : i32
    scf.if %2 {
      %cst_10 = arith.constant 0.000000e+00 : f32
      %12 = vector.broadcast %cst_10 : f32 to vector<512x128xf32>
      %c0_11 = arith.constant 0 : index
      %c0_12 = arith.constant 0 : index
      %13 = vector.load %arg6[%c0_11, %c0_12] : memref<512x128xf32, #tpu.memory_space<vmem>>, vector<512x128xf32>
      tpu.vector_store %arg6[%c0_11, %c0_12], %12 {strides = array<i32>} : memref<512x128xf32, #tpu.memory_space<vmem>>, vector<512x128xf32>,
    } else {
    }
    %c0 = arith.constant 0 : index
    %c0_1 = arith.constant 0 : index
    %3 = vector.load %arg6[%c0, %c0_1] : memref<512x128xf32, #tpu.memory_space<vmem>>, vector<512x128xf32>
    %c0_2 = arith.constant 0 : index
    %c0_3 = arith.constant 0 : index
    %4 = vector.load %arg3[%c0_2, %c0_3] : memref<512x128xf32, #tpu.memory_space<vmem>>, vector<512x128xf32>
    %c0_4 = arith.constant 0 : index
    %c0_5 = arith.constant 0 : index
    %5 = vector.load %arg4[%c0_4, %c0_5] : memref<128x128xf32, #tpu.memory_space<vmem>>, vector<128x128xf32>
    %cst = arith.constant dense<0.000000e+00> : vector<512x128xf32>
    %6 = tpu.matmul %4, %5, %cst {dimension_numbers = #tpu.dot_dimension_numbers<[1], [0], [0], [1], [0, 0, 1, 1], [], []>} : vector<512x128xf32>, vector<128x128xf32>, vector<512x128xf32> -> vector<512x128xf32>
    %7 = arith.addf %3, %6 : vector<512x128xf32>
    %c0_6 = arith.constant 0 : index
    %c0_7 = arith.constant 0 : index
    %8 = vector.load %arg6[%c0_6, %c0_7] : memref<512x128xf32, #tpu.memory_space<vmem>>, vector<512x128xf32>
    tpu.vector_store %arg6[%c0_6, %c0_7], %7 {strides = array<i32>} : memref<512x128xf32, #tpu.memory_space<vmem>>, vector<512x128xf32>,
    %c0_i32_8 = arith.constant 0 : i32
    %9 = arith.cmpi eq, %arg2, %c0_i32_8 : i32
    %10 = arith.extui %9 : i1 to i32
    %c0_i32_9 = arith.constant 0 : i32
    %11 = arith.cmpi ne, %10, %c0_i32_9 : i32
    scf.if %11 {
      %c0_10 = arith.constant 0 : index
      %c0_11 = arith.constant 0 : index
      %12 = vector.load %arg6[%c0_10, %c0_11] : memref<512x128xf32, #tpu.memory_space<vmem>>, vector<512x128xf32>
      %c0_12 = arith.constant 0 : index
      %c0_13 = arith.constant 0 : index
      %13 = vector.load %arg5[%c0_12, %c0_13] : memref<512x128xf32, #tpu.memory_space<vmem>>, vector<512x128xf32>
      tpu.vector_store %arg5[%c0_12, %c0_13], %12 {strides = array<i32>} : memref<512x128xf32, #tpu.memory_space<vmem>>, vector<512x128xf32>,
    } else {
    }
    return
  }
  func.func @transform_0(%arg0: i32, %arg1: i32, %arg2: i32) -> (i32, i32) {
    %c0_i32 = arith.constant 0 : i32
    return %arg0, %arg2 : i32, i32
  }
  func.func @transform_1(%arg0: i32, %arg1: i32, %arg2: i32) -> (i32, i32) {
    %c0_i32 = arith.constant 0 : i32
    return %arg2, %arg1 : i32, i32
  }
  func.func @transform_2(%arg0: i32, %arg1: i32, %arg2: i32) -> (i32, i32) {
    %c0_i32 = arith.constant 0 : i32
    return %arg0, %arg1 : i32, i32
  }
}

</mosaic_0001>

<llo_original>
// kernel: tpu_custom_call.1
$region0: #{tpu_custom_call.1}
  #allocation0 [shape = 'u32[]', space=smem, size = 0x4, offset = 0x4, fixed_abs, tag = 'smem constant byte address 0x4 - core index']
  #allocation1 [shape = 'u32[144,128]{1,0:T(1,128)}', space=vmem, size = 0x12000, scoped, tag = 'internal scratch']
  #allocation2 [shape = 'f32[512,128]{1,0:T(8,128)}', space=vmem, size = 0x40000, scoped, tag = 'scratch operand']
  %s0 = inlined_call_operand.hbm [shape: f32[512,128], index: 0, kind: input, shape index: {}]
  %s1 = inlined_call_operand.hbm [shape: f32[128,128], index: 1, kind: input, shape index: {}]
  %s2 = inlined_call_operand.hbm [shape: f32[512,128], index: 2, kind: output, shape index: {}]
  %s3 = sld [smem:[#allocation0]]
  $region34: #{tpu_custom_call.1} parent=0
    _
  %s5 = ssub.s32 1, %s3
  %s6 = scalar_select 0, %s5, %s3
  $region1: #{tpu_custom_call.1} parent=0
    #allocation3 [shape = 'u8[262144]{0}', space=vmem, size = 0x40000, scoped, tag = 'input window, operand 0, single buffered']
    #allocation4 [shape = 's32[1]{0}', space=sflag, size = 0x4, scoped, tag = 'scoped memory for tpu_custom_call.1']
    #allocation5 [shape = 's32[1]{0}', space=sflag, size = 0x4, scoped, tag = 'scoped memory for tpu_custom_call.1']
    #allocation6 [shape = 'u8[65536]{0}', space=vmem, size = 0x10000, scoped, tag = 'input window, operand 1, single buffered']
    #allocation7 [shape = 's32[1]{0}', space=sflag, size = 0x4, scoped, tag = 'scoped memory for tpu_custom_call.1']
    #allocation8 [shape = 'u8[262144]{0}', space=vmem, size = 0x40000, scoped, tag = 'output window, operand 0, single buffered']
    %7 = vsyncpa [#allocation4], 0
    %8 = vsyncpa [#allocation7], 0
    %9 = vsyncpa [#allocation5], 0
    // Predicated region
    $region2: #{tpu_custom_call.1} parent=1 // pred_check
      _
    $region3: #{tpu_custom_call.1} parent=1 // pred_check_branch
      %11 = sbr.rel (0) target = $region5
    $region4: #{tpu_custom_call.1} parent=1 // pred_region
      %s13 = ssub.s32 8192, 8192
      %14 = vsyncadd [#allocation4], %s13
      %s15 = sshll.u32 [#allocation3], 4
      %s16 = int_to_ptr.vmem [resolvable:$true] %s15
      %21 = dma.hbm_to_vmem [thread:$0]  %s0, 8192, %s16, [#allocation4], 128, 128, 8
    $region5: #{tpu_custom_call.1} parent=1 // pred_fallthru
      _
    // Predicated region
    $region6: #{tpu_custom_call.1} parent=1 // pred_check
      _
    $region7: #{tpu_custom_call.1} parent=1 // pred_check_branch
      %23 = sbr.rel (0) target = $region9
    $region8: #{tpu_custom_call.1} parent=1 // pred_region
      %s25 = ssub.s32 2048, 2048
      %26 = vsyncadd [#allocation7], %s25
      %s27 = sshll.u32 [#allocation6], 4
      %s28 = int_to_ptr.vmem [resolvable:$true] %s27
      %33 = dma.hbm_to_vmem [thread:$0]  %s1, 2048, %s28, [#allocation7], 128, 128, 8
    $region9: #{tpu_custom_call.1} parent=1 // pred_fallthru
      _
    // Predicated region
    $region10: #{tpu_custom_call.1} parent=1 // pred_check
      _
    $region11: #{tpu_custom_call.1} parent=1 // pred_check_branch
      %35 = sbr.rel (0) target = $region13
    $region12: #{tpu_custom_call.1} parent=1 // pred_region
      %36 = dma.done [#allocation4], 8192
    $region13: #{tpu_custom_call.1} parent=1 // pred_fallthru
      _
    // Predicated region
    $region14: #{tpu_custom_call.1} parent=1 // pred_check
      _
    $region15: #{tpu_custom_call.1} parent=1 // pred_check_branch
      %38 = sbr.rel (0) target = $region17
    $region16: #{tpu_custom_call.1} parent=1 // pred_region
      %39 = dma.done [#allocation7], 2048
    $region17: #{tpu_custom_call.1} parent=1 // pred_fallthru
      _
    %p40 = scmp.eq.s32.totalorder 0, 0
    // Predicated region
    $region18: #{tpu_custom_call.1} parent=1 // pred_check
      %p41 = pneg %p40
    $region19: #{tpu_custom_call.1} parent=1 // pred_check_branch
      %43 = sbr.rel (%p41) target = $region21
    $region20: #{tpu_custom_call.1} parent=1 // pred_region
      %44 = vst [vmem:[#allocation2] sm:$0xff] 0.0
      %45 = vst [vmem:[#allocation2 + $0x8] sm:$0xff] 0.0
      %46 = vst [vmem:[#allocation2 + $0x10] sm:$0xff] 0.0
      %47 = vst [vmem:[#allocation2 + $0x18] sm:$0xff] 0.0
      %48 = vst [vmem:[#allocation2 + $0x20] sm:$0xff] 0.0
      %49 = vst [vmem:[#allocation2 + $0x28] sm:$0xff] 0.0
      %50 = vst [vmem:[#allocation2 + $0x30] sm:$0xff] 0.0
      %51 = vst [vmem:[#allocation2 + $0x38] sm:$0xff] 0.0
      %52 = vst [vmem:[#allocation2 + $0x40] sm:$0xff] 0.0
      %53 = vst [vmem:[#allocation2 + $0x48] sm:$0xff] 0.0
      %54 = vst [vmem:[#allocation2 + $0x50] sm:$0xff] 0.0
      %55 = vst [vmem:[#allocation2 + $0x58] sm:$0xff] 0.0
      %56 = vst [vmem:[#allocation2 + $0x60] sm:$0xff] 0.0
      %57 = vst [vmem:[#allocation2 + $0x68] sm:$0xff] 0.0
      %58 = vst [vmem:[#allocation2 + $0x70] sm:$0xff] 0.0
      %59 = vst [vmem:[#allocation2 + $0x78] sm:$0xff] 0.0
      %60 = vst [vmem:[#allocation2 + $0x80] sm:$0xff] 0.0
      %61 = vst [vmem:[#allocation2 + $0x88] sm:$0xff] 0.0
      %62 = vst [vmem:[#allocation2 + $0x90] sm:$0xff] 0.0
      %63 = vst [vmem:[#allocation2 + $0x98] sm:$0xff] 0.0
      %64 = vst [vmem:[#allocation2 + $0xa0] sm:$0xff] 0.0
      %65 = vst [vmem:[#allocation2 + $0xa8] sm:$0xff] 0.0
      %66 = vst [vmem:[#allocation2 + $0xb0] sm:$0xff] 0.0
      %67 = vst [vmem:[#allocation2 + $0xb8] sm:$0xff] 0.0
      %68 = vst [vmem:[#allocation2 + $0xc0] sm:$0xff] 0.0
      %69 = vst [vmem:[#allocation2 + $0xc8] sm:$0xff] 0.0
      %70 = vst [vmem:[#allocation2 + $0xd0] sm:$0xff] 0.0
      %71 = vst [vmem:[#allocation2 + $0xd8] sm:$0xff] 0.0
      %72 = vst [vmem:[#allocation2 + $0xe0] sm:$0xff] 0.0
      %73 = vst [vmem:[#allocation2 + $0xe8] sm:$0xff] 0.0
      %74 = vst [vmem:[#allocation2 + $0xf0] sm:$0xff] 0.0
      %75 = vst [vmem:[#allocation2 + $0xf8] sm:$0xff] 0.0
      %76 = vst [vmem:[#allocation2 + $0x100] sm:$0xff] 0.0
      %77 = vst [vmem:[#allocation2 + $0x108] sm:$0xff] 0.0
      %78 = vst [vmem:[#allocation2 + $0x110] sm:$0xff] 0.0
      %79 = vst [vmem:[#allocation2 + $0x118] sm:$0xff] 0.0
      %80 = vst [vmem:[#allocation2 + $0x120] sm:$0xff] 0.0
      %81 = vst [vmem:[#allocation2 + $0x128] sm:$0xff] 0.0
      %82 = vst [vmem:[#allocation2 + $0x130] sm:$0xff] 0.0
      %83 = vst [vmem:[#allocation2 + $0x138] sm:$0xff] 0.0
      %84 = vst [vmem:[#allocation2 + $0x140] sm:$0xff] 0.0
      %85 = vst [vmem:[#allocation2 + $0x148] sm:$0xff] 0.0
      %86 = vst [vmem:[#allocation2 + $0x150] sm:$0xff] 0.0
      %87 = vst [vmem:[#allocation2 + $0x158] sm:$0xff] 0.0
      %88 = vst [vmem:[#allocation2 + $0x160] sm:$0xff] 0.0
      %89 = vst [vmem:[#allocation2 + $0x168] sm:$0xff] 0.0
      %90 = vst [vmem:[#allocation2 + $0x170] sm:$0xff] 0.0
      %91 = vst [vmem:[#allocation2 + $0x178] sm:$0xff] 0.0
      %92 = vst [vmem:[#allocation2 + $0x180] sm:$0xff] 0.0
      %93 = vst [vmem:[#allocation2 + $0x188] sm:$0xff] 0.0
      %94 = vst [vmem:[#allocation2 + $0x190] sm:$0xff] 0.0
      %95 = vst [vmem:[#allocation2 + $0x198] sm:$0xff] 0.0
      %96 = vst [vmem:[#allocation2 + $0x1a0] sm:$0xff] 0.0
      %97 = vst [vmem:[#allocation2 + $0x1a8] sm:$0xff] 0.0
      %98 = vst [vmem:[#allocation2 + $0x1b0] sm:$0xff] 0.0
      %99 = vst [vmem:[#allocation2 + $0x1b8] sm:$0xff] 0.0
      %100 = vst [vmem:[#allocation2 + $0x1c0] sm:$0xff] 0.0
      %101 = vst [vmem:[#allocation2 + $0x1c8] sm:$0xff] 0.0
      %102 = vst [vmem:[#allocation2 + $0x1d0] sm:$0xff] 0.0
      %103 = vst [vmem:[#allocation2 + $0x1d8] sm:$0xff] 0.0
      %104 = vst [vmem:[#allocation2 + $0x1e0] sm:$0xff] 0.0
      %105 = vst [vmem:[#allocation2 + $0x1e8] sm:$0xff] 0.0
      %106 = vst [vmem:[#allocation2 + $0x1f0] sm:$0xff] 0.0
      %107 = vst [vmem:[#allocation2 + $0x1f8] sm:$0xff] 0.0
    $region21: #{tpu_custom_call.1} parent=1 // pred_fallthru
      _
    %v108 = vld [vmem:[#allocation2] sm:$0xff]
    %v109 = vld [vmem:[#allocation2 + $0x8] sm:$0xff]
    %v110 = vld [vmem:[#allocation2 + $0x10] sm:$0xff]
    %v111 = vld [vmem:[#allocation2 + $0x18] sm:$0xff]
    %v112 = vld [vmem:[#allocation2 + $0x20] sm:$0xff]
    %v113 = vld [vmem:[#allocation2 + $0x28] sm:$0xff]
    %v114 = vld [vmem:[#allocation2 + $0x30] sm:$0xff]
    %v115 = vld [vmem:[#allocation2 + $0x38] sm:$0xff]
    %v116 = vld [vmem:[#allocation2 + $0x40] sm:$0xff]
    %v117 = vld [vmem:[#allocation2 + $0x48] sm:$0xff]
    %v118 = vld [vmem:[#allocation2 + $0x50] sm:$0xff]
    %v119 = vld [vmem:[#allocation2 + $0x58] sm:$0xff]
    %v120 = vld [vmem:[#allocation2 + $0x60] sm:$0xff]
    %v121 = vld [vmem:[#allocation2 + $0x68] sm:$0xff]
    %v122 = vld [vmem:[#allocation2 + $0x70] sm:$0xff]
    %v123 = vld [vmem:[#allocation2 + $0x78] sm:$0xff]
    %v124 = vld [vmem:[#allocation2 + $0x80] sm:$0xff]
    %v125 = vld [vmem:[#allocation2 + $0x88] sm:$0xff]
    %v126 = vld [vmem:[#allocation2 + $0x90] sm:$0xff]
    %v127 = vld [vmem:[#allocation2 + $0x98] sm:$0xff]
    %v128 = vld [vmem:[#allocation2 + $0xa0] sm:$0xff]
    %v129 = vld [vmem:[#allocation2 + $0xa8] sm:$0xff]
    %v130 = vld [vmem:[#allocation2 + $0xb0] sm:$0xff]
    %v131 = vld [vmem:[#allocation2 + $0xb8] sm:$0xff]
    %v132 = vld [vmem:[#allocation2 + $0xc0] sm:$0xff]
    %v133 = vld [vmem:[#allocation2 + $0xc8] sm:$0xff]
    %v134 = vld [vmem:[#allocation2 + $0xd0] sm:$0xff]
    %v135 = vld [vmem:[#allocation2 + $0xd8] sm:$0xff]
    %v136 = vld [vmem:[#allocation2 + $0xe0] sm:$0xff]
    %v137 = vld [vmem:[#allocation2 + $0xe8] sm:$0xff]
    %v138 = vld [vmem:[#allocation2 + $0xf0] sm:$0xff]
    %v139 = vld [vmem:[#allocation2 + $0xf8] sm:$0xff]
    %v140 = vld [vmem:[#allocation2 + $0x100] sm:$0xff]
    %v141 = vld [vmem:[#allocation2 + $0x108] sm:$0xff]
    %v142 = vld [vmem:[#allocation2 + $0x110] sm:$0xff]
    %v143 = vld [vmem:[#allocation2 + $0x118] sm:$0xff]
    %v144 = vld [vmem:[#allocation2 + $0x120] sm:$0xff]
    %v145 = vld [vmem:[#allocation2 + $0x128] sm:$0xff]
    %v146 = vld [vmem:[#allocation2 + $0x130] sm:$0xff]
    %v147 = vld [vmem:[#allocation2 + $0x138] sm:$0xff]
    %v148 = vld [vmem:[#allocation2 + $0x140] sm:$0xff]
    %v149 = vld [vmem:[#allocation2 + $0x148] sm:$0xff]
    %v150 = vld [vmem:[#allocation2 + $0x150] sm:$0xff]
    %v151 = vld [vmem:[#allocation2 + $0x158] sm:$0xff]
    %v152 = vld [vmem:[#allocation2 + $0x160] sm:$0xff]
    %v153 = vld [vmem:[#allocation2 + $0x168] sm:$0xff]
    %v154 = vld [vmem:[#allocation2 + $0x170] sm:$0xff]
    %v155 = vld [vmem:[#allocation2 + $0x178] sm:$0xff]
    %v156 = vld [vmem:[#allocation2 + $0x180] sm:$0xff]
    %v157 = vld [vmem:[#allocation2 + $0x188] sm:$0xff]
    %v158 = vld [vmem:[#allocation2 + $0x190] sm:$0xff]
    %v159 = vld [vmem:[#allocation2 + $0x198] sm:$0xff]
    %v160 = vld [vmem:[#allocation2 + $0x1a0] sm:$0xff]
    %v161 = vld [vmem:[#allocation2 + $0x1a8] sm:$0xff]
    %v162 = vld [vmem:[#allocation2 + $0x1b0] sm:$0xff]
    %v163 = vld [vmem:[#allocation2 + $0x1b8] sm:$0xff]
    %v164 = vld [vmem:[#allocation2 + $0x1c0] sm:$0xff]
    %v165 = vld [vmem:[#allocation2 + $0x1c8] sm:$0xff]
    %v166 = vld [vmem:[#allocation2 + $0x1d0] sm:$0xff]
    %v167 = vld [vmem:[#allocation2 + $0x1d8] sm:$0xff]
    %v168 = vld [vmem:[#allocation2 + $0x1e0] sm:$0xff]
    %v169 = vld [vmem:[#allocation2 + $0x1e8] sm:$0xff]
    %v170 = vld [vmem:[#allocation2 + $0x1f0] sm:$0xff]
    %v171 = vld [vmem:[#allocation2 + $0x1f8] sm:$0xff]
    %v172 = vld [vmem:[#allocation3] sm:$0xff]
    %v173 = vld [vmem:[#allocation3 + $0x8] sm:$0xff]
    %v174 = vld [vmem:[#allocation3 + $0x10] sm:$0xff]
    %v175 = vld [vmem:[#allocation3 + $0x18] sm:$0xff]
    %v176 = vld [vmem:[#allocation3 + $0x20] sm:$0xff]
    %v177 = vld [vmem:[#allocation3 + $0x28] sm:$0xff]
    %v178 = vld [vmem:[#allocation3 + $0x30] sm:$0xff]
    %v179 = vld [vmem:[#allocation3 + $0x38] sm:$0xff]
    %v180 = vld [vmem:[#allocation3 + $0x40] sm:$0xff]
    %v181 = vld [vmem:[#allocation3 + $0x48] sm:$0xff]
    %v182 = vld [vmem:[#allocation3 + $0x50] sm:$0xff]
    %v183 = vld [vmem:[#allocation3 + $0x58] sm:$0xff]
    %v184 = vld [vmem:[#allocation3 + $0x60] sm:$0xff]
    %v185 = vld [vmem:[#allocation3 + $0x68] sm:$0xff]
    %v186 = vld [vmem:[#allocation3 + $0x70] sm:$0xff]
    %v187 = vld [vmem:[#allocation3 + $0x78] sm:$0xff]
    %v188 = vld [vmem:[#allocation3 + $0x80] sm:$0xff]
    %v189 = vld [vmem:[#allocation3 + $0x88] sm:$0xff]
    %v190 = vld [vmem:[#allocation3 + $0x90] sm:$0xff]
    %v191 = vld [vmem:[#allocation3 + $0x98] sm:$0xff]
    %v192 = vld [vmem:[#allocation3 + $0xa0] sm:$0xff]
    %v193 = vld [vmem:[#allocation3 + $0xa8] sm:$0xff]
    %v194 = vld [vmem:[#allocation3 + $0xb0] sm:$0xff]
    %v195 = vld [vmem:[#allocation3 + $0xb8] sm:$0xff]
    %v196 = vld [vmem:[#allocation3 + $0xc0] sm:$0xff]
    %v197 = vld [vmem:[#allocation3 + $0xc8] sm:$0xff]
    %v198 = vld [vmem:[#allocation3 + $0xd0] sm:$0xff]
    %v199 = vld [vmem:[#allocation3 + $0xd8] sm:$0xff]
    %v200 = vld [vmem:[#allocation3 + $0xe0] sm:$0xff]
    %v201 = vld [vmem:[#allocation3 + $0xe8] sm:$0xff]
    %v202 = vld [vmem:[#allocation3 + $0xf0] sm:$0xff]
    %v203 = vld [vmem:[#allocation3 + $0xf8] sm:$0xff]
    %v204 = vld [vmem:[#allocation3 + $0x100] sm:$0xff]
    %v205 = vld [vmem:[#allocation3 + $0x108] sm:$0xff]
    %v206 = vld [vmem:[#allocation3 + $0x110] sm:$0xff]
    %v207 = vld [vmem:[#allocation3 + $0x118] sm:$0xff]
    %v208 = vld [vmem:[#allocation3 + $0x120] sm:$0xff]
    %v209 = vld [vmem:[#allocation3 + $0x128] sm:$0xff]
    %v210 = vld [vmem:[#allocation3 + $0x130] sm:$0xff]
    %v211 = vld [vmem:[#allocation3 + $0x138] sm:$0xff]
    %v212 = vld [vmem:[#allocation3 + $0x140] sm:$0xff]
    %v213 = vld [vmem:[#allocation3 + $0x148] sm:$0xff]
    %v214 = vld [vmem:[#allocation3 + $0x150] sm:$0xff]
    %v215 = vld [vmem:[#allocation3 + $0x158] sm:$0xff]
    %v216 = vld [vmem:[#allocation3 + $0x160] sm:$0xff]
    %v217 = vld [vmem:[#allocation3 + $0x168] sm:$0xff]
    %v218 = vld [vmem:[#allocation3 + $0x170] sm:$0xff]
    %v219 = vld [vmem:[#allocation3 + $0x178] sm:$0xff]
    %v220 = vld [vmem:[#allocation3 + $0x180] sm:$0xff]
    %v221 = vld [vmem:[#allocation3 + $0x188] sm:$0xff]
    %v222 = vld [vmem:[#allocation3 + $0x190] sm:$0xff]
    %v223 = vld [vmem:[#allocation3 + $0x198] sm:$0xff]
    %v224 = vld [vmem:[#allocation3 + $0x1a0] sm:$0xff]
    %v225 = vld [vmem:[#allocation3 + $0x1a8] sm:$0xff]
    %v226 = vld [vmem:[#allocation3 + $0x1b0] sm:$0xff]
    %v227 = vld [vmem:[#allocation3 + $0x1b8] sm:$0xff]
    %v228 = vld [vmem:[#allocation3 + $0x1c0] sm:$0xff]
    %v229 = vld [vmem:[#allocation3 + $0x1c8] sm:$0xff]
    %v230 = vld [vmem:[#allocation3 + $0x1d0] sm:$0xff]
    %v231 = vld [vmem:[#allocation3 + $0x1d8] sm:$0xff]
    %v232 = vld [vmem:[#allocation3 + $0x1e0] sm:$0xff]
    %v233 = vld [vmem:[#allocation3 + $0x1e8] sm:$0xff]
    %v234 = vld [vmem:[#allocation3 + $0x1f0] sm:$0xff]
    %v235 = vld [vmem:[#allocation3 + $0x1f8] sm:$0xff]
    %v236 = vld [vmem:[#allocation6] sm:$0xff]
    %v237 = vld [vmem:[#allocation6 + $0x8] sm:$0xff]
    %v238 = vld [vmem:[#allocation6 + $0x10] sm:$0xff]
    %v239 = vld [vmem:[#allocation6 + $0x18] sm:$0xff]
    %v240 = vld [vmem:[#allocation6 + $0x20] sm:$0xff]
    %v241 = vld [vmem:[#allocation6 + $0x28] sm:$0xff]
    %v242 = vld [vmem:[#allocation6 + $0x30] sm:$0xff]
    %v243 = vld [vmem:[#allocation6 + $0x38] sm:$0xff]
    %v244 = vld [vmem:[#allocation6 + $0x40] sm:$0xff]
    %v245 = vld [vmem:[#allocation6 + $0x48] sm:$0xff]
    %v246 = vld [vmem:[#allocation6 + $0x50] sm:$0xff]
    %v247 = vld [vmem:[#allocation6 + $0x58] sm:$0xff]
    %v248 = vld [vmem:[#allocation6 + $0x60] sm:$0xff]
    %v249 = vld [vmem:[#allocation6 + $0x68] sm:$0xff]
    %v250 = vld [vmem:[#allocation6 + $0x70] sm:$0xff]
    %v251 = vld [vmem:[#allocation6 + $0x78] sm:$0xff]
    %252 = vmatprep.subr.mxu0 0.0
    %253 = vmatpush1.msra.mxu0 %v236
    %254 = vmatprep.subr.mxu0 0.0
    %255 = vmatpush1.msra.mxu0 %v237
    %256 = vmatprep.subr.mxu0 0.0
    %257 = vmatpush1.msra.mxu0 %v238
    %258 = vmatprep.subr.mxu0 0.0
    %259 = vmatpush1.msra.mxu0 %v239
    %260 = vmatprep.subr.mxu0 0.0
    %261 = vmatpush1.msra.mxu0 %v240
    %262 = vmatprep.subr.mxu0 0.0
    %263 = vmatpush1.msra.mxu0 %v241
    %264 = vmatprep.subr.mxu0 0.0
    %265 = vmatpush1.msra.mxu0 %v242
    %266 = vmatprep.subr.mxu0 0.0
    %267 = vmatpush1.msra.mxu0 %v243
    %268 = vmatprep.subr.mxu0 0.0
    %269 = vmatpush1.msra.mxu0 %v244
    %270 = vmatprep.subr.mxu0 0.0
    %271 = vmatpush1.msra.mxu0 %v245
    %272 = vmatprep.subr.mxu0 0.0
    %273 = vmatpush1.msra.mxu0 %v246
    %274 = vmatprep.subr.mxu0 0.0
    %275 = vmatpush1.msra.mxu0 %v247
    %276 = vmatprep.subr.mxu0 0.0
    %277 = vmatpush1.msra.mxu0 %v248
    %278 = vmatprep.subr.mxu0 0.0
    %279 = vmatpush1.msra.mxu0 %v249
    %280 = vmatprep.subr.mxu0 0.0
    %281 = vmatpush1.msra.mxu0 %v250
    %282 = vmatprep.subr.mxu0 0.0
    %283 = vmatpush1.msra.mxu0 %v251
    %284 = vmatprep.subr.mxu0 0.0
    %285 = vmatpush1.msra.mxu0 0.0
    %286 = vmatprep.subr.mxu0 0.0
    %287 = vmatpush1.msra.mxu0 0.0
    %288 = vmatprep.subr.mxu0 0.0
    %289 = vmatpush1.msra.mxu0 0.0
    %290 = vmatprep.subr.mxu0 0.0
    %291 = vmatpush1.msra.mxu0 0.0
    %292 = vmatprep.subr.mxu0 0.0
    %293 = vmatpush1.msra.mxu0 0.0
    %294 = vmatprep.subr.mxu0 0.0
    %295 = vmatpush1.msra.mxu0 0.0
    %296 = vmatprep.subr.mxu0 0.0
    %297 = vmatpush1.msra.mxu0 0.0
    %298 = vmatprep.subr.mxu0 0.0
    %299 = vmatpush1.msra.mxu0 0.0
    %300 = vmatprep.subr.mxu0 0.0
    %301 = vmatpush1.msra.mxu0 0.0
    %302 = vmatprep.subr.mxu0 0.0
    %303 = vmatpush1.msra.mxu0 0.0
    %304 = vmatprep.subr.mxu0 0.0
    %305 = vmatpush1.msra.mxu0 0.0
    %306 = vmatprep.subr.mxu0 0.0
    %307 = vmatpush1.msra.mxu0 0.0
    %308 = vmatprep.subr.mxu0 0.0
    %309 = vmatpush1.msra.mxu0 0.0
    %310 = vmatprep.subr.mxu0 0.0
    %311 = vmatpush1.msra.mxu0 0.0
    %312 = vmatprep.subr.mxu0 0.0
    %313 = vmatpush1.msra.mxu0 0.0
    %314 = vmatprep.subr.mxu0 0.0
    %315 = vmatpush1.msra.mxu0 0.0
    %316 = vmatprep.mubr.f32.mxu0 0.0
    %317 = vmatmul.mubr.f32.gmra.mrb[0].mxu0 %v172
    %v318 = vpop.f32.mrb[0].mxu0
    %v319 = vadd.f32 0.0, %v318
    %v320 = vpop.f32.mrb[0].mxu0
    %321 = vmatprep.mubr.f32.mxu0 0.0
    %322 = vmatmul.mubr.f32.gmra.mrb[0].mxu0 %v173
    %v323 = vpop.f32.mrb[0].mxu0
    %v324 = vadd.f32 0.0, %v323
    %v325 = vpop.f32.mrb[0].mxu0
    %326 = vmatprep.mubr.f32.mxu0 0.0
    %327 = vmatmul.mubr.f32.gmra.mrb[0].mxu0 %v174
    %v328 = vpop.f32.mrb[0].mxu0
    %v329 = vadd.f32 0.0, %v328
    %v330 = vpop.f32.mrb[0].mxu0
    %331 = vmatprep.mubr.f32.mxu0 0.0
    %332 = vmatmul.mubr.f32.gmra.mrb[0].mxu0 %v175
    %v333 = vpop.f32.mrb[0].mxu0
    %v334 = vadd.f32 0.0, %v333
    %v335 = vpop.f32.mrb[0].mxu0
    %336 = vmatprep.mubr.f32.mxu0 0.0
    %337 = vmatmul.mubr.f32.gmra.mrb[0].mxu0 %v176
    %v338 = vpop.f32.mrb[0].mxu0
    %v339 = vadd.f32 0.0, %v338
    %v340 = vpop.f32.mrb[0].mxu0
    %341 = vmatprep.mubr.f32.mxu0 0.0
    %342 = vmatmul.mubr.f32.gmra.mrb[0].mxu0 %v177
    %v343 = vpop.f32.mrb[0].mxu0
    %v344 = vadd.f32 0.0, %v343
    %v345 = vpop.f32.mrb[0].mxu0
    %346 = vmatprep.mubr.f32.mxu0 0.0
    %347 = vmatmul.mubr.f32.gmra.mrb[0].mxu0 %v178
    %v348 = vpop.f32.mrb[0].mxu0
    %v349 = vadd.f32 0.0, %v348
    %v350 = vpop.f32.mrb[0].mxu0
    %351 = vmatprep.mubr.f32.mxu0 0.0
    %352 = vmatmul.mubr.f32.gmra.mrb[0].mxu0 %v179
    %v353 = vpop.f32.mrb[0].mxu0
    %v354 = vadd.f32 0.0, %v353
    %v355 = vpop.f32.mrb[0].mxu0
    %356 = vmatprep.mubr.f32.mxu0 0.0
    %357 = vmatmul.mubr.f32.gmra.mrb[0].mxu0 %v180
    %v358 = vpop.f32.mrb[0].mxu0
    %v359 = vadd.f32 0.0, %v358
    %v360 = vpop.f32.mrb[0].mxu0
    %361 = vmatprep.mubr.f32.mxu0 0.0
    %362 = vmatmul.mubr.f32.gmra.mrb[0].mxu0 %v181
    %v363 = vpop.f32.mrb[0].mxu0
    %v364 = vadd.f32 0.0, %v363
    %v365 = vpop.f32.mrb[0].mxu0
    %366 = vmatprep.mubr.f32.mxu0 0.0
    %367 = vmatmul.mubr.f32.gmra.mrb[0].mxu0 %v182
    %v368 = vpop.f32.mrb[0].mxu0
    %v369 = vadd.f32 0.0, %v368
    %v370 = vpop.f32.mrb[0].mxu0
    %371 = vmatprep.mubr.f32.mxu0 0.0
    %372 = vmatmul.mubr.f32.gmra.mrb[0].mxu0 %v183
    %v373 = vpop.f32.mrb[0].mxu0
    %v374 = vadd.f32 0.0, %v373
    %v375 = vpop.f32.mrb[0].mxu0
    %376 = vmatprep.mubr.f32.mxu0 0.0
    %377 = vmatmul.mubr.f32.gmra.mrb[0].mxu0 %v184
    %v378 = vpop.f32.mrb[0].mxu0
    %v379 = vadd.f32 0.0, %v378
    %v380 = vpop.f32.mrb[0].mxu0
    %381 = vmatprep.mubr.f32.mxu0 0.0
    %382 = vmatmul.mubr.f32.gmra.mrb[0].mxu0 %v185
    %v383 = vpop.f32.mrb[0].mxu0
    %v384 = vadd.f32 0.0, %v383
    %v385 = vpop.f32.mrb[0].mxu0
    %386 = vmatprep.mubr.f32.mxu0 0.0
    %387 = vmatmul.mubr.f32.gmra.mrb[0].mxu0 %v186
    %v388 = vpop.f32.mrb[0].mxu0
    %v389 = vadd.f32 0.0, %v388
    %v390 = vpop.f32.mrb[0].mxu0
    %391 = vmatprep.mubr.f32.mxu0 0.0
    %392 = vmatmul.mubr.f32.gmra.mrb[0].mxu0 %v187
    %v393 = vpop.f32.mrb[0].mxu0
    %v394 = vadd.f32 0.0, %v393
    %v395 = vpop.f32.mrb[0].mxu0
    %396 = vmatprep.mubr.f32.mxu0 0.0
    %397 = vmatmul.mubr.f32.gmra.mrb[0].mxu0 %v188
    %v398 = vpop.f32.mrb[0].mxu0
    %v399 = vadd.f32 0.0, %v398
    %v400 = vpop.f32.mrb[0].mxu0
    %401 = vmatprep.mubr.f32.mxu0 0.0
    %402 = vmatmul.mubr.f32.gmra.mrb[0].mxu0 %v189
    %v403 = vpop.f32.mrb[0].mxu0
    %v404 = vadd.f32 0.0, %v403
    %v405 = vpop.f32.mrb[0].mxu0
    %406 = vmatprep.mubr.f32.mxu0 0.0
    %407 = vmatmul.mubr.f32.gmra.mrb[0].mxu0 %v190
    %v408 = vpop.f32.mrb[0].mxu0
    %v409 = vadd.f32 0.0, %v408
    %v410 = vpop.f32.mrb[0].mxu0
    %411 = vmatprep.mubr.f32.mxu0 0.0
    %412 = vmatmul.mubr.f32.gmra.mrb[0].mxu0 %v191
    %v413 = vpop.f32.mrb[0].mxu0
    %v414 = vadd.f32 0.0, %v413
    %v415 = vpop.f32.mrb[0].mxu0
    %416 = vmatprep.mubr.f32.mxu0 0.0
    %417 = vmatmul.mubr.f32.gmra.mrb[0].mxu0 %v192
    %v418 = vpop.f32.mrb[0].mxu0
    %v419 = vadd.f32 0.0, %v418
    %v420 = vpop.f32.mrb[0].mxu0
    %421 = vmatprep.mubr.f32.mxu0 0.0
    %422 = vmatmul.mubr.f32.gmra.mrb[0].mxu0 %v193
    %v423 = vpop.f32.mrb[0].mxu0
    %v424 = vadd.f32 0.0, %v423
    %v425 = vpop.f32.mrb[0].mxu0
    %426 = vmatprep.mubr.f32.mxu0 0.0
    %427 = vmatmul.mubr.f32.gmra.mrb[0].mxu0 %v194
    %v428 = vpop.f32.mrb[0].mxu0
    %v429 = vadd.f32 0.0, %v428
    %v430 = vpop.f32.mrb[0].mxu0
    %431 = vmatprep.mubr.f32.mxu0 0.0
    %432 = vmatmul.mubr.f32.gmra.mrb[0].mxu0 %v195
    %v433 = vpop.f32.mrb[0].mxu0
    %v434 = vadd.f32 0.0, %v433
    %v435 = vpop.f32.mrb[0].mxu0
    %436 = vmatprep.mubr.f32.mxu0 0.0
    %437 = vmatmul.mubr.f32.gmra.mrb[0].mxu0 %v196
    %v438 = vpop.f32.mrb[0].mxu0
    %v439 = vadd.f32 0.0, %v438
    %v440 = vpop.f32.mrb[0].mxu0
    %441 = vmatprep.mubr.f32.mxu0 0.0
    %442 = vmatmul.mubr.f32.gmra.mrb[0].mxu0 %v197
    %v443 = vpop.f32.mrb[0].mxu0
    %v444 = vadd.f32 0.0, %v443
    %v445 = vpop.f32.mrb[0].mxu0
    %446 = vmatprep.mubr.f32.mxu0 0.0
    %447 = vmatmul.mubr.f32.gmra.mrb[0].mxu0 %v198
    %v448 = vpop.f32.mrb[0].mxu0
    %v449 = vadd.f32 0.0, %v448
    %v450 = vpop.f32.mrb[0].mxu0
    %451 = vmatprep.mubr.f32.mxu0 0.0
    %452 = vmatmul.mubr.f32.gmra.mrb[0].mxu0 %v199
    %v453 = vpop.f32.mrb[0].mxu0
    %v454 = vadd.f32 0.0, %v453
    %v455 = vpop.f32.mrb[0].mxu0
    %456 = vmatprep.mubr.f32.mxu0 0.0
    %457 = vmatmul.mubr.f32.gmra.mrb[0].mxu0 %v200
    %v458 = vpop.f32.mrb[0].mxu0
    %v459 = vadd.f32 0.0, %v458
    %v460 = vpop.f32.mrb[0].mxu0
    %461 = vmatprep.mubr.f32.mxu0 0.0
    %462 = vmatmul.mubr.f32.gmra.mrb[0].mxu0 %v201
    %v463 = vpop.f32.mrb[0].mxu0
    %v464 = vadd.f32 0.0, %v463
    %v465 = vpop.f32.mrb[0].mxu0
    %466 = vmatprep.mubr.f32.mxu0 0.0
    %467 = vmatmul.mubr.f32.gmra.mrb[0].mxu0 %v202
    %v468 = vpop.f32.mrb[0].mxu0
    %v469 = vadd.f32 0.0, %v468
    %v470 = vpop.f32.mrb[0].mxu0
    %471 = vmatprep.mubr.f32.mxu0 0.0
    %472 = vmatmul.mubr.f32.gmra.mrb[0].mxu0 %v203
    %v473 = vpop.f32.mrb[0].mxu0
    %v474 = vadd.f32 0.0, %v473
    %v475 = vpop.f32.mrb[0].mxu0
    %476 = vmatprep.mubr.f32.mxu0 0.0
    %477 = vmatmul.mubr.f32.gmra.mrb[0].mxu0 %v204
    %v478 = vpop.f32.mrb[0].mxu0
    %v479 = vadd.f32 0.0, %v478
    %v480 = vpop.f32.mrb[0].mxu0
    %481 = vmatprep.mubr.f32.mxu0 0.0
    %482 = vmatmul.mubr.f32.gmra.mrb[0].mxu0 %v205
    %v483 = vpop.f32.mrb[0].mxu0
    %v484 = vadd.f32 0.0, %v483
    %v485 = vpop.f32.mrb[0].mxu0
    %486 = vmatprep.mubr.f32.mxu0 0.0
    %487 = vmatmul.mubr.f32.gmra.mrb[0].mxu0 %v206
    %v488 = vpop.f32.mrb[0].mxu0
    %v489 = vadd.f32 0.0, %v488
    %v490 = vpop.f32.mrb[0].mxu0
    %491 = vmatprep.mubr.f32.mxu0 0.0
    %492 = vmatmul.mubr.f32.gmra.mrb[0].mxu0 %v207
    %v493 = vpop.f32.mrb[0].mxu0
    %v494 = vadd.f32 0.0, %v493
    %v495 = vpop.f32.mrb[0].mxu0
    %496 = vmatprep.mubr.f32.mxu0 0.0
    %497 = vmatmul.mubr.f32.gmra.mrb[0].mxu0 %v208
    %v498 = vpop.f32.mrb[0].mxu0
    %v499 = vadd.f32 0.0, %v498
    %v500 = vpop.f32.mrb[0].mxu0
    %501 = vmatprep.mubr.f32.mxu0 0.0
    %502 = vmatmul.mubr.f32.gmra.mrb[0].mxu0 %v209
    %v503 = vpop.f32.mrb[0].mxu0
    %v504 = vadd.f32 0.0, %v503
    %v505 = vpop.f32.mrb[0].mxu0
    %506 = vmatprep.mubr.f32.mxu0 0.0
    %507 = vmatmul.mubr.f32.gmra.mrb[0].mxu0 %v210
    %v508 = vpop.f32.mrb[0].mxu0
    %v509 = vadd.f32 0.0, %v508
    %v510 = vpop.f32.mrb[0].mxu0
    %511 = vmatprep.mubr.f32.mxu0 0.0
    %512 = vmatmul.mubr.f32.gmra.mrb[0].mxu0 %v211
    %v513 = vpop.f32.mrb[0].mxu0
    %v514 = vadd.f32 0.0, %v513
    %v515 = vpop.f32.mrb[0].mxu0
    %516 = vmatprep.mubr.f32.mxu0 0.0
    %517 = vmatmul.mubr.f32.gmra.mrb[0].mxu0 %v212
    %v518 = vpop.f32.mrb[0].mxu0
    %v519 = vadd.f32 0.0, %v518
    %v520 = vpop.f32.mrb[0].mxu0
    %521 = vmatprep.mubr.f32.mxu0 0.0
    %522 = vmatmul.mubr.f32.gmra.mrb[0].mxu0 %v213
    %v523 = vpop.f32.mrb[0].mxu0
    %v524 = vadd.f32 0.0, %v523
    %v525 = vpop.f32.mrb[0].mxu0
    %526 = vmatprep.mubr.f32.mxu0 0.0
    %527 = vmatmul.mubr.f32.gmra.mrb[0].mxu0 %v214
    %v528 = vpop.f32.mrb[0].mxu0
    %v529 = vadd.f32 0.0, %v528
    %v530 = vpop.f32.mrb[0].mxu0
    %531 = vmatprep.mubr.f32.mxu0 0.0
    %532 = vmatmul.mubr.f32.gmra.mrb[0].mxu0 %v215
    %v533 = vpop.f32.mrb[0].mxu0
    %v534 = vadd.f32 0.0, %v533
    %v535 = vpop.f32.mrb[0].mxu0
    %536 = vmatprep.mubr.f32.mxu0 0.0
    %537 = vmatmul.mubr.f32.gmra.mrb[0].mxu0 %v216
    %v538 = vpop.f32.mrb[0].mxu0
    %v539 = vadd.f32 0.0, %v538
    %v540 = vpop.f32.mrb[0].mxu0
    %541 = vmatprep.mubr.f32.mxu0 0.0
    %542 = vmatmul.mubr.f32.gmra.mrb[0].mxu0 %v217
    %v543 = vpop.f32.mrb[0].mxu0
    %v544 = vadd.f32 0.0, %v543
    %v545 = vpop.f32.mrb[0].mxu0
    %546 = vmatprep.mubr.f32.mxu0 0.0
    %547 = vmatmul.mubr.f32.gmra.mrb[0].mxu0 %v218
    %v548 = vpop.f32.mrb[0].mxu0
    %v549 = vadd.f32 0.0, %v548
    %v550 = vpop.f32.mrb[0].mxu0
    %551 = vmatprep.mubr.f32.mxu0 0.0
    %552 = vmatmul.mubr.f32.gmra.mrb[0].mxu0 %v219
    %v553 = vpop.f32.mrb[0].mxu0
    %v554 = vadd.f32 0.0, %v553
    %v555 = vpop.f32.mrb[0].mxu0
    %556 = vmatprep.mubr.f32.mxu0 0.0
    %557 = vmatmul.mubr.f32.gmra.mrb[0].mxu0 %v220
    %v558 = vpop.f32.mrb[0].mxu0
    %v559 = vadd.f32 0.0, %v558
    %v560 = vpop.f32.mrb[0].mxu0
    %561 = vmatprep.mubr.f32.mxu0 0.0
    %562 = vmatmul.mubr.f32.gmra.mrb[0].mxu0 %v221
    %v563 = vpop.f32.mrb[0].mxu0
    %v564 = vadd.f32 0.0, %v563
    %v565 = vpop.f32.mrb[0].mxu0
    %566 = vmatprep.mubr.f32.mxu0 0.0
    %567 = vmatmul.mubr.f32.gmra.mrb[0].mxu0 %v222
    %v568 = vpop.f32.mrb[0].mxu0
    %v569 = vadd.f32 0.0, %v568
    %v570 = vpop.f32.mrb[0].mxu0
    %571 = vmatprep.mubr.f32.mxu0 0.0
    %572 = vmatmul.mubr.f32.gmra.mrb[0].mxu0 %v223
    %v573 = vpop.f32.mrb[0].mxu0
    %v574 = vadd.f32 0.0, %v573
    %v575 = vpop.f32.mrb[0].mxu0
    %576 = vmatprep.mubr.f32.mxu0 0.0
    %577 = vmatmul.mubr.f32.gmra.mrb[0].mxu0 %v224
    %v578 = vpop.f32.mrb[0].mxu0
    %v579 = vadd.f32 0.0, %v578
    %v580 = vpop.f32.mrb[0].mxu0
    %581 = vmatprep.mubr.f32.mxu0 0.0
    %582 = vmatmul.mubr.f32.gmra.mrb[0].mxu0 %v225
    %v583 = vpop.f32.mrb[0].mxu0
    %v584 = vadd.f32 0.0, %v583
    %v585 = vpop.f32.mrb[0].mxu0
    %586 = vmatprep.mubr.f32.mxu0 0.0
    %587 = vmatmul.mubr.f32.gmra.mrb[0].mxu0 %v226
    %v588 = vpop.f32.mrb[0].mxu0
    %v589 = vadd.f32 0.0, %v588
    %v590 = vpop.f32.mrb[0].mxu0
    %591 = vmatprep.mubr.f32.mxu0 0.0
    %592 = vmatmul.mubr.f32.gmra.mrb[0].mxu0 %v227
    %v593 = vpop.f32.mrb[0].mxu0
    %v594 = vadd.f32 0.0, %v593
    %v595 = vpop.f32.mrb[0].mxu0
    %596 = vmatprep.mubr.f32.mxu0 0.0
    %597 = vmatmul.mubr.f32.gmra.mrb[0].mxu0 %v228
    %v598 = vpop.f32.mrb[0].mxu0
    %v599 = vadd.f32 0.0, %v598
    %v600 = vpop.f32.mrb[0].mxu0
    %601 = vmatprep.mubr.f32.mxu0 0.0
    %602 = vmatmul.mubr.f32.gmra.mrb[0].mxu0 %v229
    %v603 = vpop.f32.mrb[0].mxu0
    %v604 = vadd.f32 0.0, %v603
    %v605 = vpop.f32.mrb[0].mxu0
    %606 = vmatprep.mubr.f32.mxu0 0.0
    %607 = vmatmul.mubr.f32.gmra.mrb[0].mxu0 %v230
    %v608 = vpop.f32.mrb[0].mxu0
    %v609 = vadd.f32 0.0, %v608
    %v610 = vpop.f32.mrb[0].mxu0
    %611 = vmatprep.mubr.f32.mxu0 0.0
    %612 = vmatmul.mubr.f32.gmra.mrb[0].mxu0 %v231
    %v613 = vpop.f32.mrb[0].mxu0
    %v614 = vadd.f32 0.0, %v613
    %v615 = vpop.f32.mrb[0].mxu0
    %616 = vmatprep.mubr.f32.mxu0 0.0
    %617 = vmatmul.mubr.f32.gmra.mrb[0].mxu0 %v232
    %v618 = vpop.f32.mrb[0].mxu0
    %v619 = vadd.f32 0.0, %v618
    %v620 = vpop.f32.mrb[0].mxu0
    %621 = vmatprep.mubr.f32.mxu0 0.0
    %622 = vmatmul.mubr.f32.gmra.mrb[0].mxu0 %v233
    %v623 = vpop.f32.mrb[0].mxu0
    %v624 = vadd.f32 0.0, %v623
    %v625 = vpop.f32.mrb[0].mxu0
    %626 = vmatprep.mubr.f32.mxu0 0.0
    %627 = vmatmul.mubr.f32.gmra.mrb[0].mxu0 %v234
    %v628 = vpop.f32.mrb[0].mxu0
    %v629 = vadd.f32 0.0, %v628
    %v630 = vpop.f32.mrb[0].mxu0
    %631 = vmatprep.mubr.f32.mxu0 0.0
    %632 = vmatmul.mubr.f32.gmra.mrb[0].mxu0 %v235
    %v633 = vpop.f32.mrb[0].mxu0
    %v634 = vadd.f32 0.0, %v633
    %v635 = vpop.f32.mrb[0].mxu0
    %636 = vdwg.mxu0
    %v637 = vadd.f32 %v108, %v319
    %v638 = vadd.f32 %v109, %v324
    %v639 = vadd.f32 %v110, %v329
    %v640 = vadd.f32 %v111, %v334
    %v641 = vadd.f32 %v112, %v339
    %v642 = vadd.f32 %v113, %v344
    %v643 = vadd.f32 %v114, %v349
    %v644 = vadd.f32 %v115, %v354
    %v645 = vadd.f32 %v116, %v359
    %v646 = vadd.f32 %v117, %v364
    %v647 = vadd.f32 %v118, %v369
    %v648 = vadd.f32 %v119, %v374
    %v649 = vadd.f32 %v120, %v379
    %v650 = vadd.f32 %v121, %v384
    %v651 = vadd.f32 %v122, %v389
    %v652 = vadd.f32 %v123, %v394
    %v653 = vadd.f32 %v124, %v399
    %v654 = vadd.f32 %v125, %v404
    %v655 = vadd.f32 %v126, %v409
    %v656 = vadd.f32 %v127, %v414
    %v657 = vadd.f32 %v128, %v419
    %v658 = vadd.f32 %v129, %v424
    %v659 = vadd.f32 %v130, %v429
    %v660 = vadd.f32 %v131, %v434
    %v661 = vadd.f32 %v132, %v439
    %v662 = vadd.f32 %v133, %v444
    %v663 = vadd.f32 %v134, %v449
    %v664 = vadd.f32 %v135, %v454
    %v665 = vadd.f32 %v136, %v459
    %v666 = vadd.f32 %v137, %v464
    %v667 = vadd.f32 %v138, %v469
    %v668 = vadd.f32 %v139, %v474
    %v669 = vadd.f32 %v140, %v479
    %v670 = vadd.f32 %v141, %v484
    %v671 = vadd.f32 %v142, %v489
    %v672 = vadd.f32 %v143, %v494
    %v673 = vadd.f32 %v144, %v499
    %v674 = vadd.f32 %v145, %v504
    %v675 = vadd.f32 %v146, %v509
    %v676 = vadd.f32 %v147, %v514
    %v677 = vadd.f32 %v148, %v519
    %v678 = vadd.f32 %v149, %v524
    %v679 = vadd.f32 %v150, %v529
    %v680 = vadd.f32 %v151, %v534
    %v681 = vadd.f32 %v152, %v539
    %v682 = vadd.f32 %v153, %v544
    %v683 = vadd.f32 %v154, %v549
    %v684 = vadd.f32 %v155, %v554
    %v685 = vadd.f32 %v156, %v559
    %v686 = vadd.f32 %v157, %v564
    %v687 = vadd.f32 %v158, %v569
    %v688 = vadd.f32 %v159, %v574
    %v689 = vadd.f32 %v160, %v579
    %v690 = vadd.f32 %v161, %v584
    %v691 = vadd.f32 %v162, %v589
    %v692 = vadd.f32 %v163, %v594
    %v693 = vadd.f32 %v164, %v599
    %v694 = vadd.f32 %v165, %v604
    %v695 = vadd.f32 %v166, %v609
    %v696 = vadd.f32 %v167, %v614
    %v697 = vadd.f32 %v168, %v619
    %v698 = vadd.f32 %v169, %v624
    %v699 = vadd.f32 %v170, %v629
    %v700 = vadd.f32 %v171, %v634
    %701 = vst [vmem:[#allocation2] sm:$0xff] %v637
    %702 = vst [vmem:[#allocation2 + $0x8] sm:$0xff] %v638
    %703 = vst [vmem:[#allocation2 + $0x10] sm:$0xff] %v639
    %704 = vst [vmem:[#allocation2 + $0x18] sm:$0xff] %v640
    %705 = vst [vmem:[#allocation2 + $0x20] sm:$0xff] %v641
    %706 = vst [vmem:[#allocation2 + $0x28] sm:$0xff] %v642
    %707 = vst [vmem:[#allocation2 + $0x30] sm:$0xff] %v643
    %708 = vst [vmem:[#allocation2 + $0x38] sm:$0xff] %v644
    %709 = vst [vmem:[#allocation2 + $0x40] sm:$0xff] %v645
    %710 = vst [vmem:[#allocation2 + $0x48] sm:$0xff] %v646
    %711 = vst [vmem:[#allocation2 + $0x50] sm:$0xff] %v647
    %712 = vst [vmem:[#allocation2 + $0x58] sm:$0xff] %v648
    %713 = vst [vmem:[#allocation2 + $0x60] sm:$0xff] %v649
    %714 = vst [vmem:[#allocation2 + $0x68] sm:$0xff] %v650
    %715 = vst [vmem:[#allocation2 + $0x70] sm:$0xff] %v651
    %716 = vst [vmem:[#allocation2 + $0x78] sm:$0xff] %v652
    %717 = vst [vmem:[#allocation2 + $0x80] sm:$0xff] %v653
    %718 = vst [vmem:[#allocation2 + $0x88] sm:$0xff] %v654
    %719 = vst [vmem:[#allocation2 + $0x90] sm:$0xff] %v655
    %720 = vst [vmem:[#allocation2 + $0x98] sm:$0xff] %v656
    %721 = vst [vmem:[#allocation2 + $0xa0] sm:$0xff] %v657
    %722 = vst [vmem:[#allocation2 + $0xa8] sm:$0xff] %v658
    %723 = vst [vmem:[#allocation2 + $0xb0] sm:$0xff] %v659
    %724 = vst [vmem:[#allocation2 + $0xb8] sm:$0xff] %v660
    %725 = vst [vmem:[#allocation2 + $0xc0] sm:$0xff] %v661
    %726 = vst [vmem:[#allocation2 + $0xc8] sm:$0xff] %v662
    %727 = vst [vmem:[#allocation2 + $0xd0] sm:$0xff] %v663
    %728 = vst [vmem:[#allocation2 + $0xd8] sm:$0xff] %v664
    %729 = vst [vmem:[#allocation2 + $0xe0] sm:$0xff] %v665
    %730 = vst [vmem:[#allocation2 + $0xe8] sm:$0xff] %v666
    %731 = vst [vmem:[#allocation2 + $0xf0] sm:$0xff] %v667
    %732 = vst [vmem:[#allocation2 + $0xf8] sm:$0xff] %v668
    %733 = vst [vmem:[#allocation2 + $0x100] sm:$0xff] %v669
    %734 = vst [vmem:[#allocation2 + $0x108] sm:$0xff] %v670
    %735 = vst [vmem:[#allocation2 + $0x110] sm:$0xff] %v671
    %736 = vst [vmem:[#allocation2 + $0x118] sm:$0xff] %v672
    %737 = vst [vmem:[#allocation2 + $0x120] sm:$0xff] %v673
    %738 = vst [vmem:[#allocation2 + $0x128] sm:$0xff] %v674
    %739 = vst [vmem:[#allocation2 + $0x130] sm:$0xff] %v675
    %740 = vst [vmem:[#allocation2 + $0x138] sm:$0xff] %v676
    %741 = vst [vmem:[#allocation2 + $0x140] sm:$0xff] %v677
    %742 = vst [vmem:[#allocation2 + $0x148] sm:$0xff] %v678
    %743 = vst [vmem:[#allocation2 + $0x150] sm:$0xff] %v679
    %744 = vst [vmem:[#allocation2 + $0x158] sm:$0xff] %v680
    %745 = vst [vmem:[#allocation2 + $0x160] sm:$0xff] %v681
    %746 = vst [vmem:[#allocation2 + $0x168] sm:$0xff] %v682
    %747 = vst [vmem:[#allocation2 + $0x170] sm:$0xff] %v683
    %748 = vst [vmem:[#allocation2 + $0x178] sm:$0xff] %v684
    %749 = vst [vmem:[#allocation2 + $0x180] sm:$0xff] %v685
    %750 = vst [vmem:[#allocation2 + $0x188] sm:$0xff] %v686
    %751 = vst [vmem:[#allocation2 + $0x190] sm:$0xff] %v687
    %752 = vst [vmem:[#allocation2 + $0x198] sm:$0xff] %v688
    %753 = vst [vmem:[#allocation2 + $0x1a0] sm:$0xff] %v689
    %754 = vst [vmem:[#allocation2 + $0x1a8] sm:$0xff] %v690
    %755 = vst [vmem:[#allocation2 + $0x1b0] sm:$0xff] %v691
    %756 = vst [vmem:[#allocation2 + $0x1b8] sm:$0xff] %v692
    %757 = vst [vmem:[#allocation2 + $0x1c0] sm:$0xff] %v693
    %758 = vst [vmem:[#allocation2 + $0x1c8] sm:$0xff] %v694
    %759 = vst [vmem:[#allocation2 + $0x1d0] sm:$0xff] %v695
    %760 = vst [vmem:[#allocation2 + $0x1d8] sm:$0xff] %v696
    %761 = vst [vmem:[#allocation2 + $0x1e0] sm:$0xff] %v697
    %762 = vst [vmem:[#allocation2 + $0x1e8] sm:$0xff] %v698
    %763 = vst [vmem:[#allocation2 + $0x1f0] sm:$0xff] %v699
    %764 = vst [vmem:[#allocation2 + $0x1f8] sm:$0xff] %v700
    // Predicated region
    $region22: #{tpu_custom_call.1} parent=1 // pred_check
      %p765 = pneg %p40
    $region23: #{tpu_custom_call.1} parent=1 // pred_check_branch
      %767 = sbr.rel (%p765) target = $region25
    $region24: #{tpu_custom_call.1} parent=1 // pred_region
      %v768 = vld [vmem:[#allocation2] sm:$0xff]
      %v769 = vld [vmem:[#allocation2 + $0x8] sm:$0xff]
      %v770 = vld [vmem:[#allocation2 + $0x10] sm:$0xff]
      %v771 = vld [vmem:[#allocation2 + $0x18] sm:$0xff]
      %v772 = vld [vmem:[#allocation2 + $0x20] sm:$0xff]
      %v773 = vld [vmem:[#allocation2 + $0x28] sm:$0xff]
      %v774 = vld [vmem:[#allocation2 + $0x30] sm:$0xff]
      %v775 = vld [vmem:[#allocation2 + $0x38] sm:$0xff]
      %v776 = vld [vmem:[#allocation2 + $0x40] sm:$0xff]
      %v777 = vld [vmem:[#allocation2 + $0x48] sm:$0xff]
      %v778 = vld [vmem:[#allocation2 + $0x50] sm:$0xff]
      %v779 = vld [vmem:[#allocation2 + $0x58] sm:$0xff]
      %v780 = vld [vmem:[#allocation2 + $0x60] sm:$0xff]
      %v781 = vld [vmem:[#allocation2 + $0x68] sm:$0xff]
      %v782 = vld [vmem:[#allocation2 + $0x70] sm:$0xff]
      %v783 = vld [vmem:[#allocation2 + $0x78] sm:$0xff]
      %v784 = vld [vmem:[#allocation2 + $0x80] sm:$0xff]
      %v785 = vld [vmem:[#allocation2 + $0x88] sm:$0xff]
      %v786 = vld [vmem:[#allocation2 + $0x90] sm:$0xff]
      %v787 = vld [vmem:[#allocation2 + $0x98] sm:$0xff]
      %v788 = vld [vmem:[#allocation2 + $0xa0] sm:$0xff]
      %v789 = vld [vmem:[#allocation2 + $0xa8] sm:$0xff]
      %v790 = vld [vmem:[#allocation2 + $0xb0] sm:$0xff]
      %v791 = vld [vmem:[#allocation2 + $0xb8] sm:$0xff]
      %v792 = vld [vmem:[#allocation2 + $0xc0] sm:$0xff]
      %v793 = vld [vmem:[#allocation2 + $0xc8] sm:$0xff]
      %v794 = vld [vmem:[#allocation2 + $0xd0] sm:$0xff]
      %v795 = vld [vmem:[#allocation2 + $0xd8] sm:$0xff]
      %v796 = vld [vmem:[#allocation2 + $0xe0] sm:$0xff]
      %v797 = vld [vmem:[#allocation2 + $0xe8] sm:$0xff]
      %v798 = vld [vmem:[#allocation2 + $0xf0] sm:$0xff]
      %v799 = vld [vmem:[#allocation2 + $0xf8] sm:$0xff]
      %v800 = vld [vmem:[#allocation2 + $0x100] sm:$0xff]
      %v801 = vld [vmem:[#allocation2 + $0x108] sm:$0xff]
      %v802 = vld [vmem:[#allocation2 + $0x110] sm:$0xff]
      %v803 = vld [vmem:[#allocation2 + $0x118] sm:$0xff]
      %v804 = vld [vmem:[#allocation2 + $0x120] sm:$0xff]
      %v805 = vld [vmem:[#allocation2 + $0x128] sm:$0xff]
      %v806 = vld [vmem:[#allocation2 + $0x130] sm:$0xff]
      %v807 = vld [vmem:[#allocation2 + $0x138] sm:$0xff]
      %v808 = vld [vmem:[#allocation2 + $0x140] sm:$0xff]
      %v809 = vld [vmem:[#allocation2 + $0x148] sm:$0xff]
      %v810 = vld [vmem:[#allocation2 + $0x150] sm:$0xff]
      %v811 = vld [vmem:[#allocation2 + $0x158] sm:$0xff]
      %v812 = vld [vmem:[#allocation2 + $0x160] sm:$0xff]
      %v813 = vld [vmem:[#allocation2 + $0x168] sm:$0xff]
      %v814 = vld [vmem:[#allocation2 + $0x170] sm:$0xff]
      %v815 = vld [vmem:[#allocation2 + $0x178] sm:$0xff]
      %v816 = vld [vmem:[#allocation2 + $0x180] sm:$0xff]
      %v817 = vld [vmem:[#allocation2 + $0x188] sm:$0xff]
      %v818 = vld [vmem:[#allocation2 + $0x190] sm:$0xff]
      %v819 = vld [vmem:[#allocation2 + $0x198] sm:$0xff]
      %v820 = vld [vmem:[#allocation2 + $0x1a0] sm:$0xff]
      %v821 = vld [vmem:[#allocation2 + $0x1a8] sm:$0xff]
      %v822 = vld [vmem:[#allocation2 + $0x1b0] sm:$0xff]
      %v823 = vld [vmem:[#allocation2 + $0x1b8] sm:$0xff]
      %v824 = vld [vmem:[#allocation2 + $0x1c0] sm:$0xff]
      %v825 = vld [vmem:[#allocation2 + $0x1c8] sm:$0xff]
      %v826 = vld [vmem:[#allocation2 + $0x1d0] sm:$0xff]
      %v827 = vld [vmem:[#allocation2 + $0x1d8] sm:$0xff]
      %v828 = vld [vmem:[#allocation2 + $0x1e0] sm:$0xff]
      %v829 = vld [vmem:[#allocation2 + $0x1e8] sm:$0xff]
      %v830 = vld [vmem:[#allocation2 + $0x1f0] sm:$0xff]
      %v831 = vld [vmem:[#allocation2 + $0x1f8] sm:$0xff]
      %832 = vst [vmem:[#allocation8] sm:$0xff] %v768
      %833 = vst [vmem:[#allocation8 + $0x8] sm:$0xff] %v769
      %834 = vst [vmem:[#allocation8 + $0x10] sm:$0xff] %v770
      %835 = vst [vmem:[#allocation8 + $0x18] sm:$0xff] %v771
      %836 = vst [vmem:[#allocation8 + $0x20] sm:$0xff] %v772
      %837 = vst [vmem:[#allocation8 + $0x28] sm:$0xff] %v773
      %838 = vst [vmem:[#allocation8 + $0x30] sm:$0xff] %v774
      %839 = vst [vmem:[#allocation8 + $0x38] sm:$0xff] %v775
      %840 = vst [vmem:[#allocation8 + $0x40] sm:$0xff] %v776
      %841 = vst [vmem:[#allocation8 + $0x48] sm:$0xff] %v777
      %842 = vst [vmem:[#allocation8 + $0x50] sm:$0xff] %v778
      %843 = vst [vmem:[#allocation8 + $0x58] sm:$0xff] %v779
      %844 = vst [vmem:[#allocation8 + $0x60] sm:$0xff] %v780
      %845 = vst [vmem:[#allocation8 + $0x68] sm:$0xff] %v781
      %846 = vst [vmem:[#allocation8 + $0x70] sm:$0xff] %v782
      %847 = vst [vmem:[#allocation8 + $0x78] sm:$0xff] %v783
      %848 = vst [vmem:[#allocation8 + $0x80] sm:$0xff] %v784
      %849 = vst [vmem:[#allocation8 + $0x88] sm:$0xff] %v785
      %850 = vst [vmem:[#allocation8 + $0x90] sm:$0xff] %v786
      %851 = vst [vmem:[#allocation8 + $0x98] sm:$0xff] %v787
      %852 = vst [vmem:[#allocation8 + $0xa0] sm:$0xff] %v788
      %853 = vst [vmem:[#allocation8 + $0xa8] sm:$0xff] %v789
      %854 = vst [vmem:[#allocation8 + $0xb0] sm:$0xff] %v790
      %855 = vst [vmem:[#allocation8 + $0xb8] sm:$0xff] %v791
      %856 = vst [vmem:[#allocation8 + $0xc0] sm:$0xff] %v792
      %857 = vst [vmem:[#allocation8 + $0xc8] sm:$0xff] %v793
      %858 = vst [vmem:[#allocation8 + $0xd0] sm:$0xff] %v794
      %859 = vst [vmem:[#allocation8 + $0xd8] sm:$0xff] %v795
      %860 = vst [vmem:[#allocation8 + $0xe0] sm:$0xff] %v796
      %861 = vst [vmem:[#allocation8 + $0xe8] sm:$0xff] %v797
      %862 = vst [vmem:[#allocation8 + $0xf0] sm:$0xff] %v798
      %863 = vst [vmem:[#allocation8 + $0xf8] sm:$0xff] %v799
      %864 = vst [vmem:[#allocation8 + $0x100] sm:$0xff] %v800
      %865 = vst [vmem:[#allocation8 + $0x108] sm:$0xff] %v801
      %866 = vst [vmem:[#allocation8 + $0x110] sm:$0xff] %v802
      %867 = vst [vmem:[#allocation8 + $0x118] sm:$0xff] %v803
      %868 = vst [vmem:[#allocation8 + $0x120] sm:$0xff] %v804
      %869 = vst [vmem:[#allocation8 + $0x128] sm:$0xff] %v805
      %870 = vst [vmem:[#allocation8 + $0x130] sm:$0xff] %v806
      %871 = vst [vmem:[#allocation8 + $0x138] sm:$0xff] %v807
      %872 = vst [vmem:[#allocation8 + $0x140] sm:$0xff] %v808
      %873 = vst [vmem:[#allocation8 + $0x148] sm:$0xff] %v809
      %874 = vst [vmem:[#allocation8 + $0x150] sm:$0xff] %v810
      %875 = vst [vmem:[#allocation8 + $0x158] sm:$0xff] %v811
      %876 = vst [vmem:[#allocation8 + $0x160] sm:$0xff] %v812
      %877 = vst [vmem:[#allocation8 + $0x168] sm:$0xff] %v813
      %878 = vst [vmem:[#allocation8 + $0x170] sm:$0xff] %v814
      %879 = vst [vmem:[#allocation8 + $0x178] sm:$0xff] %v815
      %880 = vst [vmem:[#allocation8 + $0x180] sm:$0xff] %v816
      %881 = vst [vmem:[#allocation8 + $0x188] sm:$0xff] %v817
      %882 = vst [vmem:[#allocation8 + $0x190] sm:$0xff] %v818
      %883 = vst [vmem:[#allocation8 + $0x198] sm:$0xff] %v819
      %884 = vst [vmem:[#allocation8 + $0x1a0] sm:$0xff] %v820
      %885 = vst [vmem:[#allocation8 + $0x1a8] sm:$0xff] %v821
      %886 = vst [vmem:[#allocation8 + $0x1b0] sm:$0xff] %v822
      %887 = vst [vmem:[#allocation8 + $0x1b8] sm:$0xff] %v823
      %888 = vst [vmem:[#allocation8 + $0x1c0] sm:$0xff] %v824
      %889 = vst [vmem:[#allocation8 + $0x1c8] sm:$0xff] %v825
      %890 = vst [vmem:[#allocation8 + $0x1d0] sm:$0xff] %v826
      %891 = vst [vmem:[#allocation8 + $0x1d8] sm:$0xff] %v827
      %892 = vst [vmem:[#allocation8 + $0x1e0] sm:$0xff] %v828
      %893 = vst [vmem:[#allocation8 + $0x1e8] sm:$0xff] %v829
      %894 = vst [vmem:[#allocation8 + $0x1f0] sm:$0xff] %v830
      %895 = vst [vmem:[#allocation8 + $0x1f8] sm:$0xff] %v831
    $region25: #{tpu_custom_call.1} parent=1 // pred_fallthru
      _
    // Predicated region
    $region26: #{tpu_custom_call.1} parent=1 // pred_check
      _
    $region27: #{tpu_custom_call.1} parent=1 // pred_check_branch
      %897 = sbr.rel (0) target = $region29
    $region28: #{tpu_custom_call.1} parent=1 // pred_region
      %s899 = ssub.s32 8192, 8192
      %900 = vsyncadd [#allocation5], %s899
      %s901 = sshll.u32 [#allocation8], 4
      %s902 = int_to_ptr.vmem [resolvable:$true] %s901
      %907 = dma.vmem_to_hbm [thread:$0]  %s902, 8192, %s2, [#allocation5], 128, 128, 8
    $region29: #{tpu_custom_call.1} parent=1 // pred_fallthru
      _
    // Predicated region
    $region30: #{tpu_custom_call.1} parent=1 // pred_check
      _
    $region31: #{tpu_custom_call.1} parent=1 // pred_check_branch
      %909 = sbr.rel (0) target = $region33
    $region32: #{tpu_custom_call.1} parent=1 // pred_region
      %910 = dma.done [#allocation5], 8192
    $region33: #{tpu_custom_call.1} parent=1 // pred_fallthru
      _
    %911 = vsyncpa [#allocation4], 1
    %912 = vsyncpa [#allocation7], 1
    %913 = vsyncpa [#allocation5], 1

</llo_original>
